<compile_context>
chip_gen: v7x
topology: tpu7x:2x2x1
jax: 0.10.0
libtpu: 0.0.40
codegen_flags: <defaults>
</compile_context>

<pallas_src>
import jax
import jax.numpy as jnp
from jax import lax
from jax.experimental import pallas as pl
from jax.experimental.pallas import tpu as pltpu

EPS = 1e-6  # nn.LayerNorm(embedding_dim, elementwise_affine=False, eps=1e-06)


def _round_up(v, m):
    return ((v + m - 1) // m) * m


def _vmem_budgets():
    """Generation-aware VMEM limits (v5e/v6e: 128 MiB physical, v7x: 64 MiB)."""
    try:
        cap = int(pltpu.get_tpu_info().vmem_capacity_bytes)
    except Exception:
        cap = 64 * 1024 * 1024  # conservative (v7x-sized) fallback
    vmem_limit = min((cap * 3) // 4, 96 * 1024 * 1024)   # leave headroom
    tile_budget = vmem_limit // 2                         # budget for x tiles + temps
    return vmem_limit, tile_budget


def _pick_seq_tile(S, D_pad, itemsize, tile_budget, batch):
    """Pick a sequence-tile row count (multiple of 8) that fits the VMEM budget.

    Accounting per tile row: 2x double-buffered input + 2x double-buffered output
    (x dtype) plus ~3 f32 temporaries (cast / centered / normalized) from the
    two-pass reduction.
    """
    bytes_per_row = D_pad * (4 * itemsize + 3 * 4)
    max_ts = max(8, min(2048, (tile_budget // bytes_per_row) // 8 * 8))
    s_ceil = _round_up(S, 8)
    n_tiles = max(1, pl.cdiv(s_ceil, max_ts))
    # v7x has 2 TensorCores sharing HBM: avoid a 1-tile grid when it can be split.
    if batch * n_tiles < 2 and s_ceil > 8:
        n_tiles = 2
    ts = min(max_ts, _round_up(pl.cdiv(s_ceil, n_tiles), 8))
    return ts


def _make_ln_mod_kernel(d_true, d_pad):
    """LayerNorm (no affine) + adaLN-Zero modulation on one (1, TS, D_pad) tile."""
    mask_lanes = d_pad != d_true
    inv_d = 1.0 / float(d_true)

    def kernel(shift_ref, scale1p_ref, x_ref, o_ref):
        x = x_ref[0].astype(jnp.float32)                       # (TS, D_pad)
        if mask_lanes:
            # Feature dim was zero-padded to a multiple of 128 for lane-dense
            # stores; reduce only over the true D lanes.
            lane = lax.broadcasted_iota(jnp.int32, x.shape, 1)
            m = (lane < d_true).astype(jnp.float32)
            xm = x * m
            mean = jnp.sum(xm, axis=-1, keepdims=True) * inv_d
            xc = (x - mean) * m
            var = jnp.sum(xc * xc, axis=-1, keepdims=True) * inv_d
        else:
            mean = jnp.mean(x, axis=-1, keepdims=True)
            xc = x - mean
            var = jnp.mean(xc * xc, axis=-1, keepdims=True)     # biased, like nn.LayerNorm
        x_norm = xc * lax.rsqrt(var + EPS)
        # "(1 + scale)" is pre-folded into scale1p in the wrapper.
        o_ref[0] = (x_norm * scale1p_ref[0].astype(jnp.float32)
                    + shift_ref[0].astype(jnp.float32)).astype(o_ref.dtype)

    return kernel


def ada_layer_norm_zero_continuous(x, emb, w, b):
    """x: (B, S, D); emb: (B, D); w: (D, 6D) (transposed torch weight); b: (6D,)."""
    B, S, D = x.shape
    out_dtype = emb.dtype

    # ---- Conditioning branch (hoisted to XLA): SiLU + Linear, f32 ----
    e = emb.astype(jnp.float32)
    e = e * jax.nn.sigmoid(e)
    proj = e @ w.astype(jnp.float32) + b.astype(jnp.float32)         # (B, 6D)
    shift_msa, scale_msa, gate_msa, shift_mlp, scale_mlp, gate_mlp = jnp.split(
        proj, 6, axis=1)
    scale1p_msa = scale_msa + 1.0   # fold "1 +" out of the kernel

    # ---- Tiling / padding decisions ----
    itemsize = jnp.dtype(x.dtype).itemsize
    vmem_limit, tile_budget = _vmem_budgets()
    D_pad = _round_up(D, 128)                    # lane-dense stores (unmasked vst)
    TS = _pick_seq_tile(S, D_pad, itemsize, tile_budget, B)
    n_tiles = pl.cdiv(S, TS)
    S_pad = n_tiles * TS

    xk = x
    if S_pad != S or D_pad != D:
        xk = jnp.pad(x, ((0, 0), (0, S_pad - S), (0, D_pad - D)))
    shift3 = shift_msa.reshape(B, 1, D)
    scale3 = scale1p_msa.reshape(B, 1, D)
    if D_pad != D:
        shift3 = jnp.pad(shift3, ((0, 0), (0, 0), (0, D_pad - D)))
        scale3 = jnp.pad(scale3, ((0, 0), (0, 0), (0, D_pad - D)))

    # shift/scale index is constant along the inner (sequence) grid axis, so the
    # pipeline does not re-DMA them between consecutive steps.
    vec_spec = pl.BlockSpec((1, 1, D_pad), lambda bi, si: (bi, 0, 0))
    x_spec = pl.BlockSpec((1, TS, D_pad), lambda bi, si: (bi, si, 0))

    cost = pl.CostEstimate(
        flops=8 * B * S_pad * D_pad,
        transcendentals=B * S_pad,
        bytes_accessed=2 * B * S_pad * D_pad * itemsize + 2 * B * D_pad * 4,
    )

    x_out = pl.pallas_call(
        _make_ln_mod_kernel(D, D_pad),
        out_shape=jax.ShapeDtypeStruct((B, S_pad, D_pad), x.dtype),
        grid_spec=pltpu.PrefetchScalarGridSpec(
            num_scalar_prefetch=0,
            grid=(B, n_tiles),
            in_specs=[vec_spec, vec_spec, x_spec],
            out_specs=x_spec,
        ),
        compiler_params=pltpu.CompilerParams(
            dimension_semantics=("parallel", "parallel"),
            vmem_limit_bytes=vmem_limit),
        cost_estimate=cost,
    )(shift3, scale3, xk)

    if S_pad != S or D_pad != D:
        x_out = x_out[:, :S, :D]

    return (x_out,
            gate_msa.astype(out_dtype),
            shift_mlp.astype(out_dtype),
            scale_mlp.astype(out_dtype),
            gate_mlp.astype(out_dtype))


if __name__ == "__main__":
    B, S, D = 2, 8, 32
    key = jax.random.PRNGKey(0)
    k1, k2, k3, k4 = jax.random.split(key, 4)

    x = jax.random.normal(k1, (B, S, D), jnp.float32)
    emb = jax.random.normal(k2, (B, D), jnp.float32)

    # Deterministic synthetic Linear params: torch weight shape (6D, D), bias (6D,)
    w_pt = jax.random.normal(k3, (6 * D, D), jnp.float32) * 0.02
    b_pt = jax.random.normal(k4, (6 * D,), jnp.float32) * 0.02
    w = w_pt.T  # (D, 6D) for the kernel/wrapper

    outs = ada_layer_norm_zero_continuous(x, emb, w, b_pt)
    outs = jax.block_until_ready(outs)

    # Pure-JAX reference (mirrors the PyTorch forward exactly)
    e = emb * jax.nn.sigmoid(emb)
    proj = e @ w + b_pt
    sh_msa, sc_msa, g_msa, sh_mlp, sc_mlp, g_mlp = jnp.split(proj, 6, axis=1)
    mean = x.mean(-1, keepdims=True)
    var = ((x - mean) ** 2).mean(-1, keepdims=True)
    x_norm = (x - mean) / jnp.sqrt(var + EPS)
    x_ref = x_norm * (1.0 + sc_msa[:, None]) + sh_msa[:, None]
    refs = (x_ref, g_msa, sh_mlp, sc_mlp, g_mlp)

    for o, r in zip(outs, refs):
        assert o.shape == r.shape, (o.shape, r.shape)
        assert jnp.allclose(o, r, atol=1e-4, rtol=1e-4), float(jnp.max(jnp.abs(o - r)))

    print("KERNEL_OK")
</pallas_src>

<mosaic_0001>
module attributes {stable_mosaic.version = 11 : i64} {
  func.func @kernel(%arg0: i32, %arg1: i32, %arg2: memref<1x1x128xf32, #tpu.memory_space<vmem>>, %arg3: memref<1x1x128xf32, #tpu.memory_space<vmem>>, %arg4: memref<1x8x128xf32, #tpu.memory_space<vmem>>, %arg5: memref<1x8x128xf32, #tpu.memory_space<vmem>>) attributes {dimension_semantics = [#tpu.dimension_semantics<parallel>, #tpu.dimension_semantics<parallel>], iteration_bounds = array<i64: 2, 1>, scalar_prefetch = 0 : i64, scratch_operands = 0 : i64, tpu.core_type = #tpu.core_type<tc>, window_params = [{transform_indices = @transform_0, window_bounds = array<i64: 1, 1, 128>}, {transform_indices = @transform_1, window_bounds = array<i64: 1, 1, 128>}, {transform_indices = @transform_2, window_bounds = array<i64: 1, 8, 128>}, {transform_indices = @transform_3, window_bounds = array<i64: 1, 8, 128>}]} {
    %c0 = arith.constant 0 : index
    %c0_0 = arith.constant 0 : index
    %c0_1 = arith.constant 0 : index
    %0 = vector.load %arg4[%c0, %c0_0, %c0_1] : memref<1x8x128xf32, #tpu.memory_space<vmem>>, vector<1x8x128xf32>
    %1 = vector.shape_cast %0 : vector<1x8x128xf32> to vector<8x128xf32>
    %2 = tpu.iota {dimensions = array<i32: 1>} : vector<8x128xi32>
    %c32_i32 = arith.constant 32 : i32
    %3 = vector.broadcast %c32_i32 : i32 to vector<8x128xi32>
    %4 = arith.cmpi slt, %2, %3 : vector<8x128xi32>
    %5 = arith.extui %4 : vector<8x128xi1> to vector<8x128xi32>
    %6 = arith.sitofp %5 : vector<8x128xi32> to vector<8x128xf32>
    %7 = arith.mulf %1, %6 : vector<8x128xf32>
    %cst = arith.constant dense<0.000000e+00> : vector<8xf32>
    %8 = vector.multi_reduction <add>, %7, %cst [1] : vector<8x128xf32> to vector<8xf32>
    %9 = vector.shape_cast %8 : vector<8xf32> to vector<8x1xf32>
    %cst_2 = arith.constant 3.125000e-02 : f32
    %10 = vector.broadcast %cst_2 : f32 to vector<8x1xf32>
    %11 = arith.mulf %9, %10 : vector<8x1xf32>
    %12 = vector.broadcast %11 : vector<8x1xf32> to vector<8x128xf32>
    %13 = arith.subf %1, %12 : vector<8x128xf32>
    %14 = arith.mulf %13, %6 : vector<8x128xf32>
    %15 = arith.mulf %14, %14 : vector<8x128xf32>
    %cst_3 = arith.constant dense<0.000000e+00> : vector<8xf32>
    %16 = vector.multi_reduction <add>, %15, %cst_3 [1] : vector<8x128xf32> to vector<8xf32>
    %17 = vector.shape_cast %16 : vector<8xf32> to vector<8x1xf32>
    %cst_4 = arith.constant 3.125000e-02 : f32
    %18 = vector.broadcast %cst_4 : f32 to vector<8x1xf32>
    %19 = arith.mulf %17, %18 : vector<8x1xf32>
    %cst_5 = arith.constant 9.99999997E-7 : f32
    %20 = vector.broadcast %cst_5 : f32 to vector<8x1xf32>
    %21 = arith.addf %19, %20 : vector<8x1xf32>
    %22 = math.rsqrt %21 : vector<8x1xf32>
    %23 = vector.broadcast %22 : vector<8x1xf32> to vector<8x128xf32>
    %24 = arith.mulf %14, %23 : vector<8x128xf32>
    %c0_6 = arith.constant 0 : index
    %c0_7 = arith.constant 0 : index
    %c0_8 = arith.constant 0 : index
    %25 = vector.load %arg3[%c0_6, %c0_7, %c0_8] : memref<1x1x128xf32, #tpu.memory_space<vmem>>, vector<1x1x128xf32>
    %26 = vector.shape_cast %25 : vector<1x1x128xf32> to vector<1x128xf32>
    %27 = vector.broadcast %26 : vector<1x128xf32> to vector<8x128xf32>
    %28 = arith.mulf %24, %27 : vector<8x128xf32>
    %c0_9 = arith.constant 0 : index
    %c0_10 = arith.constant 0 : index
    %c0_11 = arith.constant 0 : index
    %29 = vector.load %arg2[%c0_9, %c0_10, %c0_11] : memref<1x1x128xf32, #tpu.memory_space<vmem>>, vector<1x1x128xf32>
    %30 = vector.shape_cast %29 : vector<1x1x128xf32> to vector<1x128xf32>
    %31 = vector.broadcast %30 : vector<1x128xf32> to vector<8x128xf32>
    %32 = arith.addf %28, %31 : vector<8x128xf32>
    %c0_12 = arith.constant 0 : index
    %c0_13 = arith.constant 0 : index
    %c0_14 = arith.constant 0 : index
    %33 = vector.load %arg5[%c0_12, %c0_13, %c0_14] : memref<1x8x128xf32, #tpu.memory_space<vmem>>, vector<1x8x128xf32>
    %34 = vector.shape_cast %33 : vector<1x8x128xf32> to vector<8x128xf32>
    %35 = vector.shape_cast %32 : vector<8x128xf32> to vector<1x8x128xf32>
    tpu.vector_store %arg5[%c0_12, %c0_13, %c0_14], %35 {strides = array<i32>} : memref<1x8x128xf32, #tpu.memory_space<vmem>>, vector<1x8x128xf32>,
    return
  }
  func.func @transform_0(%arg0: i32, %arg1: i32) -> (i32, i32, i32) {
    %c0_i32 = arith.constant 0 : i32
    %c0_i32_0 = arith.constant 0 : i32
    %c0_i32_1 = arith.constant 0 : i32
    return %arg0, %c0_i32, %c0_i32_0 : i32, i32, i32
  }
  func.func @transform_1(%arg0: i32, %arg1: i32) -> (i32, i32, i32) {
    %c0_i32 = arith.constant 0 : i32
    %c0_i32_0 = arith.constant 0 : i32
    %c0_i32_1 = arith.constant 0 : i32
    return %arg0, %c0_i32, %c0_i32_0 : i32, i32, i32
  }
  func.func @transform_2(%arg0: i32, %arg1: i32) -> (i32, i32, i32) {
    %c0_i32 = arith.constant 0 : i32
    %c0_i32_0 = arith.constant 0 : i32
    return %arg0, %arg1, %c0_i32 : i32, i32, i32
  }
  func.func @transform_3(%arg0: i32, %arg1: i32) -> (i32, i32, i32) {
    %c0_i32 = arith.constant 0 : i32
    %c0_i32_0 = arith.constant 0 : i32
    return %arg0, %arg1, %c0_i32 : i32, i32, i32
  }
}

</mosaic_0001>

<llo_original>
// kernel: tpu_custom_call.1
$region0: #{tpu_custom_call.1}
  #allocation0 [shape = 'u32[]', space=smem, size = 0x4, offset = 0x4, fixed_abs, tag = 'smem constant byte address 0x4 - core index']
  #allocation1 [shape = 'u32[144,128]{1,0:T(1,128)}', space=vmem, size = 0x12000, scoped, tag = 'internal scratch']
  %s0 = inlined_call_operand.hbm [shape: f32[2,1,128], index: 0, kind: input, shape index: {}]
  %s1 = inlined_call_operand.vmem [shape: f32[2,1,128], index: 1, kind: input, shape index: {}]
  %s2 = inlined_call_operand.hbm [shape: f32[2,8,128], index: 2, kind: input, shape index: {}]
  %s3 = inlined_call_operand.hbm [shape: f32[2,8,128], index: 3, kind: output, shape index: {}]
  %s4 = sld [smem:[#allocation0]]
  $region53: #{tpu_custom_call.1} parent=0
    _
  %s6 = ssub.s32 1, %s4
  %s7 = scalar_select 0, %s6, %s4
  $region1: #{tpu_custom_call.1} parent=0
    #allocation2 [shape = 'u8[1024]{0}', space=vmem, size = 0x400, scoped, tag = 'input window, operand 0']
    #allocation3 [shape = 's32[2]{0}', space=sflag, size = 0x8, scoped, tag = 'scoped memory for tpu_custom_call.1']
    #allocation4 [shape = 's32[2]{0}', space=sflag, size = 0x8, scoped, tag = 'scoped memory for tpu_custom_call.1']
    #allocation5 [shape = 'u8[8192]{0}', space=vmem, size = 0x2000, scoped, tag = 'input window, operand 2']
    #allocation6 [shape = 's32[2]{0}', space=sflag, size = 0x8, scoped, tag = 'scoped memory for tpu_custom_call.1']
    #allocation7 [shape = 'u8[8192]{0}', space=vmem, size = 0x2000, scoped, tag = 'output window, operand 0']
    %8 = vsyncpa [#allocation3], 0
    %s9 = scalar_lea.sflag [#allocation3], 1
    %10 = vsyncpa %s9, 0
    %11 = vsyncpa [#allocation6], 0
    %s12 = scalar_lea.sflag [#allocation6], 1
    %13 = vsyncpa %s12, 0
    %14 = vsyncpa [#allocation4], 0
    %s15 = scalar_lea.sflag [#allocation4], 1
    %16 = vsyncpa %s15, 0
    loop: start=0, step=1, limit=4
    $region2: #{tpu_custom_call.1} parent=1 // loop_pre_header
      _
    $region3: #{tpu_custom_call.1} parent=1 // loop_header
      %s18 = sphi 0, %s22
      %p19 = scmp.ge.s32.totalorder %s18, 4
      %s25 = sphi 0, %s37
      %s26 = sphi 0, %s33
      %s27 = sphi 0, %s25
      %s28 = sphi 0, %s26
      %s29 = sphi 0, %s27
      %s30 = sphi 0, %s28
      %s40 = sphi 0, %s42
      %s43 = sphi 0, %s40
      %s44 = sphi 0, %s43
      %s60 = sphi 0, %s44
      %s66 = sphi 0, %s68
      %s69 = sphi 0, %s66
      %s70 = sphi 0, %s69
      %s86 = sphi 0, %s70
      %s94 = sphi 0, %s96
      %s97 = sphi 0, %s94
      %s98 = sphi 0, %s97
      %s114 = sphi 0, %s98
      %s122 = sphi 0, %s124
      %s125 = sphi 0, %s122
      %s126 = sphi 0, %s125
      %s142 = sphi 0, %s126
    $region4: #{tpu_custom_call.1} parent=1 // loop_header_branch
      %21 = sbr.rel (%p19) target = $region8
    $region5: #{tpu_custom_call.1} parent=1 // loop_body
      %s23 = ssub.s32 %s18, 1
      %s24 = ssub.s32 %s18, 2
      %s31 = sadd.s32 1, %s26
      %p32 = scmp.ge.s32.totalorder %s31, 1
      %s33 = scalar_select %p32, 0, %s31
      %s34 = sadd.s32 1, %s25
      %s35 = scalar_select %p32, %s34, %s25
      %p36 = scmp.ge.s32.totalorder %s35, 2
      %s37 = scalar_select %p36, 0, %s35
      %s38 = ssub.s32 %s25, %s37
      %p39 = scmp.eq.s32.totalorder %s38, 0
      %s41 = sadd.s32 %s40, 1
      %s42 = scalar_select %p39, %s40, %s41
      %p45 = pneg %p39
      %p46 = scmp.eq.s32.totalorder %s18, 1
      %p47 = por %p45, %p46
      %p48 = scmp.ne.s32.totalorder %s40, %s43
      %p49 = scmp.eq.s32.totalorder %s18, 0
      %p50 = por %p48, %p49
      %p51 = scmp.ne.s32.totalorder %s40, %s43
      %p52 = scmp.eq.s32.totalorder %s23, 1
      %p53 = por %p51, %p52
      %p54 = scmp.ne.s32.totalorder %s43, %s44
      %p55 = scmp.eq.s32.totalorder %s23, 0
      %p56 = por %p54, %p55
      %p57 = scmp.ne.s32.totalorder %s43, %s44
      %p58 = scmp.eq.s32.totalorder %s24, 1
      %p59 = por %p57, %p58
      %p61 = scmp.ne.s32.totalorder %s44, %s60
      %p62 = scmp.eq.s32.totalorder %s24, 0
      %p63 = por %p61, %p62
      %s64 = ssub.s32 %s25, %s37
      %p65 = scmp.eq.s32.totalorder %s64, 0
      %s67 = sadd.s32 %s66, 1
      %s68 = scalar_select %p65, %s66, %s67
      %p71 = pneg %p65
      %p72 = scmp.eq.s32.totalorder %s18, 1
      %p73 = por %p71, %p72
      %p74 = scmp.ne.s32.totalorder %s66, %s69
      %p75 = scmp.eq.s32.totalorder %s18, 0
      %p76 = por %p74, %p75
      %p77 = scmp.ne.s32.totalorder %s66, %s69
      %p78 = scmp.eq.s32.totalorder %s23, 1
      %p79 = por %p77, %p78
      %p80 = scmp.ne.s32.totalorder %s69, %s70
      %p81 = scmp.eq.s32.totalorder %s23, 0
      %p82 = por %p80, %p81
      %p83 = scmp.ne.s32.totalorder %s69, %s70
      %p84 = scmp.eq.s32.totalorder %s24, 1
      %p85 = por %p83, %p84
      %p87 = scmp.ne.s32.totalorder %s70, %s86
      %p88 = scmp.eq.s32.totalorder %s24, 0
      %p89 = por %p87, %p88
      %s90 = ssub.s32 %s25, %s37
      %s91 = ssub.s32 %s26, %s33
      %s92 = sor.u32 %s90, %s91
      %p93 = scmp.eq.s32.totalorder %s92, 0
      %s95 = sadd.s32 %s94, 1
      %s96 = scalar_select %p93, %s94, %s95
      %p99 = pneg %p93
      %p100 = scmp.eq.s32.totalorder %s18, 1
      %p101 = por %p99, %p100
      %p102 = scmp.ne.s32.totalorder %s94, %s97
      %p103 = scmp.eq.s32.totalorder %s18, 0
      %p104 = por %p102, %p103
      %p105 = scmp.ne.s32.totalorder %s94, %s97
      %p106 = scmp.eq.s32.totalorder %s23, 1
      %p107 = por %p105, %p106
      %p108 = scmp.ne.s32.totalorder %s97, %s98
      %p109 = scmp.eq.s32.totalorder %s23, 0
      %p110 = por %p108, %p109
      %p111 = scmp.ne.s32.totalorder %s97, %s98
      %p112 = scmp.eq.s32.totalorder %s24, 1
      %p113 = por %p111, %p112
      %p115 = scmp.ne.s32.totalorder %s98, %s114
      %p116 = scmp.eq.s32.totalorder %s24, 0
      %p117 = por %p115, %p116
      %s118 = ssub.s32 %s25, %s37
      %s119 = ssub.s32 %s26, %s33
      %s120 = sor.u32 %s118, %s119
      %p121 = scmp.eq.s32.totalorder %s120, 0
      %s123 = sadd.s32 %s122, 1
      %s124 = scalar_select %p121, %s122, %s123
      %p127 = pneg %p121
      %p128 = scmp.eq.s32.totalorder %s18, 1
      %p129 = por %p127, %p128
      %p130 = scmp.ne.s32.totalorder %s122, %s125
      %p131 = scmp.eq.s32.totalorder %s18, 0
      %p132 = por %p130, %p131
      %p133 = scmp.ne.s32.totalorder %s122, %s125
      %p134 = scmp.eq.s32.totalorder %s23, 1
      %p135 = por %p133, %p134
      %p136 = scmp.ne.s32.totalorder %s125, %s126
      %p137 = scmp.eq.s32.totalorder %s23, 0
      %p138 = por %p136, %p137
      %p139 = scmp.ne.s32.totalorder %s125, %s126
      %p140 = scmp.eq.s32.totalorder %s24, 1
      %p141 = por %p139, %p140
      %p143 = scmp.ne.s32.totalorder %s126, %s142
      %p144 = scmp.eq.s32.totalorder %s24, 0
      %p145 = por %p143, %p144
      %p146 = scmp.le.s32.totalorder 1, %s18
      %p147 = scmp.lt.s32.totalorder %s18, 3
      %p148 = pnand %p146, %p147
      %p149 = pneg %p148
      // Predicated region
      $region9: #{tpu_custom_call.1} parent=5 // pred_check
        _
      $region10: #{tpu_custom_call.1} parent=5 // pred_check_branch
        %151 = sbr.rel (%p148) target = $region12
      $region11: #{tpu_custom_call.1} parent=5 // pred_region
        %s152 = ssub.s32 %s18, 1
      $region12: #{tpu_custom_call.1} parent=5 // pred_fallthru
        _
      %p153 = scmp.lt.s32.totalorder %s18, 2
      // Predicated region
      $region13: #{tpu_custom_call.1} parent=5 // pred_check
        %p154 = pneg %p153
      $region14: #{tpu_custom_call.1} parent=5 // pred_check_branch
        %156 = sbr.rel (%p154) target = $region16
      $region15: #{tpu_custom_call.1} parent=5 // pred_region
        // Predicated region
        $region17: #{tpu_custom_call.1} parent=15 // pred_check
          %p157 = pneg %p50
        $region18: #{tpu_custom_call.1} parent=15 // pred_check_branch
          %159 = sbr.rel (%p157) target = $region20
        $region19: #{tpu_custom_call.1} parent=15 // pred_region
          %s160 = sand.u32 %s40, 1
          %s161 = scalar_lea.sflag [#allocation3], %s160
          %s162 = sand.u32 %s40, 1
          %s163 = scalar_lea.vmem [#allocation2], %s162
          %s165 = ssub.s32 16, 16
          %166 = vsyncadd %s161, %s165
          %s167 = smul.addr %s25, 16
          %s168 = scalar_lea.hbm %s0, %s167
          %s170 = sshll.u32 %s163, 4
          %s171 = int_to_ptr.vmem [resolvable:$true] %s170
          %173 = dma.hbm_to_vmem [thread:$0]  %s168, 16, %s171, %s161
        $region20: #{tpu_custom_call.1} parent=15 // pred_fallthru
          _
        // Predicated region
        $region21: #{tpu_custom_call.1} parent=15 // pred_check
          %p174 = pneg %p76
        $region22: #{tpu_custom_call.1} parent=15 // pred_check_branch
          %176 = sbr.rel (%p174) target = $region24
        $region23: #{tpu_custom_call.1} parent=15 // pred_region
          %p177 = scmp.lt.s32.totalorder %s25, 1
          %s178 = scalar_select %p177, %s25, 1
          %s179 = scalar_lea.vmem %s1, %s178
        $region24: #{tpu_custom_call.1} parent=15 // pred_fallthru
          _
        // Predicated region
        $region25: #{tpu_custom_call.1} parent=15 // pred_check
          %p180 = pneg %p104
        $region26: #{tpu_custom_call.1} parent=15 // pred_check_branch
          %182 = sbr.rel (%p180) target = $region28
        $region27: #{tpu_custom_call.1} parent=15 // pred_region
          %s183 = sand.u32 %s94, 1
          %s184 = scalar_lea.sflag [#allocation6], %s183
          %s185 = sand.u32 %s94, 1
          %s186 = smul.addr %s185, 8
          %s187 = scalar_lea.vmem [#allocation5], %s186
          %s189 = ssub.s32 128, 128
          %190 = vsyncadd %s184, %s189
          %s191 = sadd.s32 %s26, %s25
          %s192 = smul.addr %s191, 128
          %s193 = scalar_lea.hbm %s2, %s192
          %s195 = sshll.u32 %s187, 4
          %s196 = int_to_ptr.vmem [resolvable:$true] %s195
          %198 = dma.hbm_to_vmem [thread:$0]  %s193, 128, %s196, %s184
        $region28: #{tpu_custom_call.1} parent=15 // pred_fallthru
          _
      $region16: #{tpu_custom_call.1} parent=5 // pred_fallthru
        _
      %p199 = scmp.le.s32.totalorder 1, %s18
      %p200 = scmp.lt.s32.totalorder %s18, 3
      %p201 = pnand %p199, %p200
      %p202 = pneg %p201
      // Predicated region
      $region29: #{tpu_custom_call.1} parent=5 // pred_check
        _
      $region30: #{tpu_custom_call.1} parent=5 // pred_check_branch
        %204 = sbr.rel (%p201) target = $region32
      $region31: #{tpu_custom_call.1} parent=5 // pred_region
        %s205 = ssub.s32 %s18, 1
        %s206 = sand.u32 %s43, 1
        %s207 = scalar_lea.sflag [#allocation3], %s206
        %s208 = sand.u32 %s43, 1
        %s209 = scalar_lea.vmem [#allocation2], %s208
        // Predicated region
        $region33: #{tpu_custom_call.1} parent=31 // pred_check
          %p210 = pneg %p56
        $region34: #{tpu_custom_call.1} parent=31 // pred_check_branch
          %212 = sbr.rel (%p210) target = $region36
        $region35: #{tpu_custom_call.1} parent=31 // pred_region
          %213 = dma.done %s207, 16
        $region36: #{tpu_custom_call.1} parent=31 // pred_fallthru
          _
        %s214 = sand.u32 %s97, 1
        %s215 = scalar_lea.sflag [#allocation6], %s214
        %s216 = sand.u32 %s97, 1
        %s217 = smul.addr %s216, 8
        %s218 = scalar_lea.vmem [#allocation5], %s217
        // Predicated region
        $region37: #{tpu_custom_call.1} parent=31 // pred_check
          %p219 = pneg %p110
        $region38: #{tpu_custom_call.1} parent=31 // pred_check_branch
          %221 = sbr.rel (%p219) target = $region40
        $region39: #{tpu_custom_call.1} parent=31 // pred_region
          %222 = dma.done %s215, 128
        $region40: #{tpu_custom_call.1} parent=31 // pred_fallthru
          _
        %s223 = sand.u32 %s43, 1
        %s224 = scalar_lea.sflag [#allocation3], %s223
        %s225 = sand.u32 %s43, 1
        %s226 = scalar_lea.vmem [#allocation2], %s225
        %p227 = pneg %p56
        %p228 = pneg %p53
        %p229 = scmp.lt.s32.totalorder %s27, 1
        %s230 = scalar_select %p229, %s27, 1
        %s231 = scalar_lea.vmem %s1, %s230
        %p232 = pneg %p82
        %p233 = pneg %p79
        %s234 = sand.u32 %s97, 1
        %s235 = scalar_lea.sflag [#allocation6], %s234
        %s236 = sand.u32 %s97, 1
        %s237 = smul.addr %s236, 8
        %s238 = scalar_lea.vmem [#allocation5], %s237
        %p239 = pneg %p110
        %p240 = pneg %p107
        %p241 = pneg %p138
        %p242 = pneg %p135
        %s243 = sand.u32 %s125, 1
        %s244 = scalar_lea.sflag [#allocation4], %s243
        %s245 = sand.u32 %s125, 1
        %s246 = smul.addr %s245, 8
        %s247 = scalar_lea.vmem [#allocation7], %s246
        %p248 = scmp.lt.s32.totalorder %s27, 1
        %s249 = scalar_select %p248, %s27, 1
        %s250 = scalar_lea.vmem %s1, %s249
        %v251 = vld [vmem:[%s218] sm:$0xff]
        %v252 = vlaneseq
        %v253 = vand.u32 %v252, 127
        %vm254 = vcmp.lt.s32.totalorder %v253, 32
        %v255 = vsel %vm254, 1, 0
        %v256 = vcvt.s32.f32 %v255
        %v257 = vmul.f32 %v251, %v256
        %258 = vadd.xlane.f32.xlu0 %v257
        %v259 = vpop.xlane.xlu0 %258
        %v260 = vmul.f32 %v259, 0.03125
        %v261 = vsub.f32 %v251, %v260
        %v262 = vmul.f32 %v261, %v256
        %v263 = vmul.f32 %v262, %v262
        %264 = vadd.xlane.f32.xlu0 %v263
        %v265 = vpop.xlane.xlu0 %264
        %v266 = vmul.f32 %v265, 0.03125
        %v267 = vadd.f32 %v266, 1e-06
        %v268 = vrsqrt.pop %v267
        %v269 = vmul.f32 %v262, %v268
        %v270 = vld [vmem:[%s250] sm:$0x1]
        %v272 = vlaneseq
        %v273 = vshrl.u32 %v272, 7
        %v274 = vsub.s32 0, %v273
        %v275 = vrot.slane %v270, %v274
        %v277 = vmul.f32 %v269, %v275
        %v278 = vld [vmem:[%s209] sm:$0x1]
        %v280 = vlaneseq
        %v281 = vshrl.u32 %v280, 7
        %v282 = vsub.s32 0, %v281
        %v283 = vrot.slane %v278, %v282
        %v285 = vadd.f32 %v277, %v283
        %286 = vst [vmem:[%s247] sm:$0xff] %v285
        %s287 = sand.u32 %s125, 1
        %s288 = scalar_lea.sflag [#allocation4], %s287
        %s289 = sand.u32 %s125, 1
        %s290 = smul.addr %s289, 8
        %s291 = scalar_lea.vmem [#allocation7], %s290
        // Predicated region
        $region41: #{tpu_custom_call.1} parent=31 // pred_check
          %p292 = pneg %p135
        $region42: #{tpu_custom_call.1} parent=31 // pred_check_branch
          %294 = sbr.rel (%p292) target = $region44
        $region43: #{tpu_custom_call.1} parent=31 // pred_region
          %s296 = ssub.s32 128, 128
          %297 = vsyncadd %s288, %s296
          %s298 = sadd.s32 %s28, %s27
          %s299 = smul.addr %s298, 128
          %s300 = scalar_lea.hbm %s3, %s299
          %s302 = sshll.u32 %s291, 4
          %s303 = int_to_ptr.vmem [resolvable:$true] %s302
          %305 = dma.vmem_to_hbm [thread:$0]  %s303, 128, %s300, %s288
        $region44: #{tpu_custom_call.1} parent=31 // pred_fallthru
          _
      $region32: #{tpu_custom_call.1} parent=5 // pred_fallthru
        _
      %p306 = scmp.le.s32.totalorder 2, %s18
      // Predicated region
      $region45: #{tpu_custom_call.1} parent=5 // pred_check
        %p307 = pneg %p306
      $region46: #{tpu_custom_call.1} parent=5 // pred_check_branch
        %309 = sbr.rel (%p307) target = $region48
      $region47: #{tpu_custom_call.1} parent=5 // pred_region
        %s310 = ssub.s32 %s18, 2
        // Predicated region
        $region49: #{tpu_custom_call.1} parent=47 // pred_check
          %p311 = pneg %p141
        $region50: #{tpu_custom_call.1} parent=47 // pred_check_branch
          %313 = sbr.rel (%p311) target = $region52
        $region51: #{tpu_custom_call.1} parent=47 // pred_region
          %s314 = sand.u32 %s126, 1
          %s315 = scalar_lea.sflag [#allocation4], %s314
          %s316 = sand.u32 %s126, 1
          %s317 = smul.addr %s316, 8
          %s318 = scalar_lea.vmem [#allocation7], %s317
          %319 = dma.done %s315, 128
        $region52: #{tpu_custom_call.1} parent=47 // pred_fallthru
          _
      $region48: #{tpu_custom_call.1} parent=5 // pred_fallthru
        _
    $region6: #{tpu_custom_call.1} parent=1 // loop_footer
      %s22 = sadd.s32 1, %s18
    $region7: #{tpu_custom_call.1} parent=1 // loop_footer_branch
      %17 = sbr.rel target = $region3
    $region8: #{tpu_custom_call.1} parent=1 // loop_exit
      _
    %320 = vsyncpa [#allocation3], 1
    %s321 = scalar_lea.sflag [#allocation3], 1
    %322 = vsyncpa %s321, 1
    %323 = vsyncpa [#allocation6], 1
    %s324 = scalar_lea.sflag [#allocation6], 1
    %325 = vsyncpa %s324, 1
    %326 = vsyncpa [#allocation4], 1
    %s327 = scalar_lea.sflag [#allocation4], 1
    %328 = vsyncpa %s327, 1

</llo_original>
